<compile_context>
chip_gen: v7x
topology: tpu7x:2x2x1
jax: 0.10.0
libtpu: 0.0.40
codegen_flags: <defaults>
</compile_context>

<pallas_src>
import math
import functools

import jax
import jax.numpy as jnp
from jax.experimental import pallas as pl
from jax.experimental.pallas import tpu as pltpu


_LANE_ALIGN = 256  # v6e/v7x MXU is 2x256x256; over-aligning on v5e (128) is harmless.


def _round_up(x: int, m: int) -> int:
    return ((x + m - 1) // m) * m


def _sublane_align(dtype) -> int:
    # Packed sublane multiple: f32 -> 8, bf16 -> 16, int8/fp8 -> 32.
    itemsize = jnp.dtype(dtype).itemsize
    return max(8, 32 // max(itemsize, 1))


def _linear_kernel(x_ref, w_ref, b_ref, o_ref, acc_ref, *, precision=None):
    """One (tm, tn) output tile, accumulated over the K grid axis."""
    k = pl.program_id(2)

    @pl.when(k == 0)
    def _():
        # Seed the accumulator with the bias (broadcast over rows); this removes
        # the epilogue add entirely.
        acc_ref[...] = jnp.broadcast_to(
            b_ref[...].astype(jnp.float32), acc_ref.shape)

    acc_ref[...] += jnp.dot(
        x_ref[...], w_ref[...],
        preferred_element_type=jnp.float32,
        precision=precision,
    )

    @pl.when(k == pl.num_programs(2) - 1)
    def _():
        o_ref[...] = acc_ref[...].astype(o_ref.dtype)


def prepare_linear_params(weight, bias=None, *, tn=512, tk=1024,
                          compute_dtype=jnp.bfloat16):
    """One-time prep of PyTorch-convention params for the Pallas kernel.

    weight: (out_dim, in_dim)  -> transposed to (in_dim, out_dim), cast to
            compute_dtype (bf16 by default to feed the MXU at peak rate) and
            zero-padded to the kernel's tile alignment so NO per-call weight
            padding/cast happens in HBM.
    bias:   (out_dim,) or None -> (1, n_pad) float32 (added to the f32 acc).

    Returns (weight_t_padded, bias_2d_padded, out_dim).
    """
    weight = jnp.asarray(weight)
    out_dim, in_dim = weight.shape

    tn_eff = min(tn, _round_up(out_dim, _LANE_ALIGN))
    tk_eff = min(tk, _round_up(in_dim, _LANE_ALIGN))
    n_pad = _round_up(out_dim, tn_eff)
    k_pad = _round_up(in_dim, tk_eff)

    w_t = weight.T  # (in_dim, out_dim)
    if compute_dtype is not None:
        w_t = w_t.astype(compute_dtype)
    if (k_pad, n_pad) != (in_dim, out_dim):
        w_t = jnp.pad(w_t, ((0, k_pad - in_dim), (0, n_pad - out_dim)))

    if bias is None:
        b2 = jnp.zeros((1, n_pad), jnp.float32)
    else:
        b2 = jnp.asarray(bias, jnp.float32).reshape(1, out_dim)
        if n_pad != out_dim:
            b2 = jnp.pad(b2, ((0, 0), (0, n_pad - out_dim)))

    return w_t, b2, out_dim


def linear_norm_forward(x, weight_t, bias2d, *, out_dim=None,
                        tm=512, tn=512, tk=1024,
                        compute_dtype=jnp.bfloat16,
                        precision=None,
                        vmem_limit_bytes=48 * 1024 * 1024):
    """y = x @ weight_t + bias  (== PyTorch nn.Linear: x @ W.T + b).

    x:        (..., in_dim)
    weight_t: (k_pad, n_pad)  pre-transposed (and normally pre-padded/pre-cast
              via prepare_linear_params).
    bias2d:   (1, n_pad) float32.
    out_dim:  logical output features (<= n_pad); defaults to weight_t.shape[1].

    Default compute is bf16 operands with f32 accumulation (documented MXU
    behaviour; f32 operands at default precision are not bit-exact either).
    For highest f32 fidelity pass compute_dtype=None, precision=lax.Precision.HIGHEST.
    """
    k_w, n_w = weight_t.shape
    if out_dim is None:
        out_dim = n_w

    lead_shape = x.shape[:-1]
    in_dim = x.shape[-1]
    m = math.prod(lead_shape) if lead_shape else 1
    out_dtype = x.dtype

    if m == 0:  # degenerate leading dimension
        return jnp.zeros((*lead_shape, out_dim), dtype=out_dtype)

    x2 = x.reshape(m, in_dim)
    if compute_dtype is not None:
        x2 = x2.astype(compute_dtype)

    w2 = weight_t
    if compute_dtype is not None and w2.dtype != jnp.dtype(compute_dtype):
        w2 = w2.astype(compute_dtype)  # no-op when prepared correctly
    b2 = bias2d

    sub_align = _sublane_align(x2.dtype)

    # --- tile planning (matches prepare_linear_params so weight pads are no-ops)
    tm_eff = min(tm, _round_up(m, sub_align))
    tn_eff = min(tn, _round_up(n_w, _LANE_ALIGN))
    tk_eff = min(tk, _round_up(max(in_dim, k_w), _LANE_ALIGN))

    m_pad = _round_up(m, tm_eff)
    n_pad = _round_up(n_w, tn_eff)
    k_pad = _round_up(max(in_dim, k_w), tk_eff)

    # Per-call padding: normally only x (activations); weight/bias already padded.
    if (m_pad, k_pad) != (m, in_dim):
        x2 = jnp.pad(x2, ((0, m_pad - m), (0, k_pad - in_dim)))
    if (k_pad, n_pad) != w2.shape:
        w2 = jnp.pad(w2, ((0, k_pad - w2.shape[0]), (0, n_pad - w2.shape[1])))
    if n_pad != b2.shape[1]:
        b2 = jnp.pad(b2, ((0, 0), (0, n_pad - b2.shape[1])))

    grid_m = m_pad // tm_eff
    grid_n = n_pad // tn_eff
    # v7x megacore: if the parallel (M, N) grid is 1x1 but N splits into two
    # lane-aligned halves, split it so both TensorCores get work.
    if grid_m == 1 and grid_n == 1:
        half_n = n_pad // 2
        if half_n >= _LANE_ALIGN and half_n % _LANE_ALIGN == 0:
            tn_eff = half_n
            grid_n = 2

    grid = (grid_m, grid_n, k_pad // tk_eff)

    cost = pl.CostEstimate(
        flops=2 * m_pad * n_pad * k_pad,
        transcendentals=0,
        bytes_accessed=(
            x2.size * x2.dtype.itemsize
            + w2.size * w2.dtype.itemsize
            + b2.size * b2.dtype.itemsize
            + m_pad * n_pad * jnp.dtype(out_dtype).itemsize
        ),
    )

    kernel = functools.partial(_linear_kernel, precision=precision)

    y2 = pl.pallas_call(
        kernel,
        out_shape=jax.ShapeDtypeStruct((m_pad, n_pad), out_dtype),
        grid_spec=pltpu.PrefetchScalarGridSpec(
            num_scalar_prefetch=0,
            grid=grid,
            in_specs=[
                pl.BlockSpec((tm_eff, tk_eff), lambda i, j, k: (i, k)),
                pl.BlockSpec((tk_eff, tn_eff), lambda i, j, k: (k, j)),
                pl.BlockSpec((1, tn_eff), lambda i, j, k: (0, j)),
            ],
            out_specs=pl.BlockSpec((tm_eff, tn_eff), lambda i, j, k: (i, j)),
            scratch_shapes=[pltpu.VMEM((tm_eff, tn_eff), jnp.float32)],
        ),
        compiler_params=pltpu.CompilerParams(
            dimension_semantics=("parallel", "parallel", "arbitrary"),
            vmem_limit_bytes=vmem_limit_bytes,
        ),
        cost_estimate=cost,
    )(x2, w2, b2)

    y2 = y2[:m, :out_dim]
    return y2.reshape(*lead_shape, out_dim)


def init_linear_norm_params(key, in_dim, out_dim, w_init_gain="linear",
                            dtype=jnp.float32):
    """xavier_uniform_ init matching the PyTorch module (weight in torch layout)."""
    gain = 1.0  # torch.nn.init.calculate_gain('linear') == 1.0
    bound = gain * math.sqrt(6.0 / (in_dim + out_dim))
    wkey, bkey = jax.random.split(key)
    weight = jax.random.uniform(wkey, (out_dim, in_dim), dtype=dtype,
                                minval=-bound, maxval=bound)
    # nn.Linear default bias init: U(-1/sqrt(fan_in), 1/sqrt(fan_in))
    b_bound = 1.0 / math.sqrt(in_dim)
    bias = jax.random.uniform(bkey, (out_dim,), dtype=dtype,
                              minval=-b_bound, maxval=b_bound)
    return weight, bias


if __name__ == "__main__":
    key = jax.random.PRNGKey(0)
    kx, kp = jax.random.split(key)

    batch, seq, in_dim, out_dim = 2, 8, 32, 64
    x = jax.random.normal(kx, (batch, seq, in_dim), dtype=jnp.float32)
    weight, bias = init_linear_norm_params(kp, in_dim, out_dim)

    # One-time parameter prep: transpose, pad, cast to bf16 (not per forward call).
    weight_t, bias2d, n_features = prepare_linear_params(weight, bias)

    fwd = jax.jit(functools.partial(linear_norm_forward, out_dim=n_features))
    y = fwd(x, weight_t, bias2d)
    y = jax.block_until_ready(y)

    # Cross-check against plain-JAX reference (PyTorch semantics: x @ W.T + b).
    # bf16 operands / f32 accumulation => loose-ish tolerance.
    y_ref = x @ weight.T + bias
    assert y.shape == (batch, seq, out_dim)
    max_err = float(jnp.max(jnp.abs(y - y_ref)))
    assert jnp.allclose(y, y_ref, atol=3e-2, rtol=3e-2), max_err

    print("KERNEL_OK")
</pallas_src>

<mosaic_0001>
module attributes {stable_mosaic.version = 11 : i64} {
  func.func @_linear_kernel(%arg0: i32, %arg1: i32, %arg2: i32, %arg3: memref<16x256xbf16, #tpu.memory_space<vmem>>, %arg4: memref<256x256xbf16, #tpu.memory_space<vmem>>, %arg5: memref<1x256xf32, #tpu.memory_space<vmem>>, %arg6: memref<16x256xf32, #tpu.memory_space<vmem>>, %arg7: memref<16x256xf32, #tpu.memory_space<vmem>>) attributes {dimension_semantics = [#tpu.dimension_semantics<parallel>, #tpu.dimension_semantics<parallel>, #tpu.dimension_semantics<arbitrary>], iteration_bounds = array<i64: 1, 1, 1>, scalar_prefetch = 0 : i64, scratch_operands = 1 : i64, tpu.core_type = #tpu.core_type<tc>, window_params = [{transform_indices = @transform_0, window_bounds = array<i64: 16, 256>}, {transform_indices = @transform_1, window_bounds = array<i64: 256, 256>}, {transform_indices = @transform_2, window_bounds = array<i64: 1, 256>}, {transform_indices = @transform_3, window_bounds = array<i64: 16, 256>}]} {
    %c0_i32 = arith.constant 0 : i32
    %0 = arith.cmpi eq, %arg2, %c0_i32 : i32
    %1 = arith.extui %0 : i1 to i32
    %c0_i32_0 = arith.constant 0 : i32
    %2 = arith.cmpi ne, %1, %c0_i32_0 : i32
    scf.if %2 {
      %c0_10 = arith.constant 0 : index
      %c0_11 = arith.constant 0 : index
      %12 = vector.load %arg5[%c0_10, %c0_11] : memref<1x256xf32, #tpu.memory_space<vmem>>, vector<1x256xf32>
      %13 = vector.shape_cast %12 : vector<1x256xf32> to vector<1x256xf32>
      %14 = vector.broadcast %13 : vector<1x256xf32> to vector<16x256xf32>
      %c0_12 = arith.constant 0 : index
      %c0_13 = arith.constant 0 : index
      %15 = vector.load %arg7[%c0_12, %c0_13] : memref<16x256xf32, #tpu.memory_space<vmem>>, vector<16x256xf32>
      tpu.vector_store %arg7[%c0_12, %c0_13], %14 {strides = array<i32>} : memref<16x256xf32, #tpu.memory_space<vmem>>, vector<16x256xf32>,
    } else {
    }
    %c0 = arith.constant 0 : index
    %c0_1 = arith.constant 0 : index
    %3 = vector.load %arg7[%c0, %c0_1] : memref<16x256xf32, #tpu.memory_space<vmem>>, vector<16x256xf32>
    %c0_2 = arith.constant 0 : index
    %c0_3 = arith.constant 0 : index
    %4 = vector.load %arg3[%c0_2, %c0_3] : memref<16x256xbf16, #tpu.memory_space<vmem>>, vector<16x256xbf16>
    %c0_4 = arith.constant 0 : index
    %c0_5 = arith.constant 0 : index
    %5 = vector.load %arg4[%c0_4, %c0_5] : memref<256x256xbf16, #tpu.memory_space<vmem>>, vector<256x256xbf16>
    %cst = arith.constant dense<0.000000e+00> : vector<16x256xf32>
    %6 = tpu.matmul %4, %5, %cst {dimension_numbers = #tpu.dot_dimension_numbers<[1], [0], [0], [1], [0, 0, 1, 1], [], []>} : vector<16x256xbf16>, vector<256x256xbf16>, vector<16x256xf32> -> vector<16x256xf32>
    %7 = arith.addf %3, %6 : vector<16x256xf32>
    %c0_6 = arith.constant 0 : index
    %c0_7 = arith.constant 0 : index
    %8 = vector.load %arg7[%c0_6, %c0_7] : memref<16x256xf32, #tpu.memory_space<vmem>>, vector<16x256xf32>
    tpu.vector_store %arg7[%c0_6, %c0_7], %7 {strides = array<i32>} : memref<16x256xf32, #tpu.memory_space<vmem>>, vector<16x256xf32>,
    %c0_i32_8 = arith.constant 0 : i32
    %9 = arith.cmpi eq, %arg2, %c0_i32_8 : i32
    %10 = arith.extui %9 : i1 to i32
    %c0_i32_9 = arith.constant 0 : i32
    %11 = arith.cmpi ne, %10, %c0_i32_9 : i32
    scf.if %11 {
      %c0_10 = arith.constant 0 : index
      %c0_11 = arith.constant 0 : index
      %12 = vector.load %arg7[%c0_10, %c0_11] : memref<16x256xf32, #tpu.memory_space<vmem>>, vector<16x256xf32>
      %c0_12 = arith.constant 0 : index
      %c0_13 = arith.constant 0 : index
      %13 = vector.load %arg6[%c0_12, %c0_13] : memref<16x256xf32, #tpu.memory_space<vmem>>, vector<16x256xf32>
      tpu.vector_store %arg6[%c0_12, %c0_13], %12 {strides = array<i32>} : memref<16x256xf32, #tpu.memory_space<vmem>>, vector<16x256xf32>,
    } else {
    }
    return
  }
  func.func @transform_0(%arg0: i32, %arg1: i32, %arg2: i32) -> (i32, i32) {
    %c0_i32 = arith.constant 0 : i32
    return %arg0, %arg2 : i32, i32
  }
  func.func @transform_1(%arg0: i32, %arg1: i32, %arg2: i32) -> (i32, i32) {
    %c0_i32 = arith.constant 0 : i32
    return %arg2, %arg1 : i32, i32
  }
  func.func @transform_2(%arg0: i32, %arg1: i32, %arg2: i32) -> (i32, i32) {
    %c0_i32 = arith.constant 0 : i32
    %c0_i32_0 = arith.constant 0 : i32
    return %c0_i32, %arg1 : i32, i32
  }
  func.func @transform_3(%arg0: i32, %arg1: i32, %arg2: i32) -> (i32, i32) {
    %c0_i32 = arith.constant 0 : i32
    return %arg0, %arg1 : i32, i32
  }
}

</mosaic_0001>

<llo_original>
// kernel: linear_norm_forward.1
$region0: #{linear_norm_forward.1}
  #allocation0 [shape = 'u32[]', space=smem, size = 0x4, offset = 0x4, fixed_abs, tag = 'smem constant byte address 0x4 - core index']
  #allocation1 [shape = 'u32[144,128]{1,0:T(1,128)}', space=vmem, size = 0x12000, scoped, tag = 'internal scratch']
  #allocation2 [shape = 'f32[16,256]{1,0:T(8,128)}', space=vmem, size = 0x4000, scoped, tag = 'scratch operand']
  %s0 = inlined_call_operand.vmem [shape: bf16[16,256], index: 0, kind: input, shape index: {}]
  %s1 = inlined_call_operand.hbm [shape: bf16[256,256], index: 1, kind: input, shape index: {}]
  %s2 = inlined_call_operand.vmem [shape: f32[1,256], index: 2, kind: input, shape index: {}]
  %s3 = inlined_call_operand.vmem [shape: f32[16,256], index: 3, kind: output, shape index: {}]
  %s4 = sld [smem:[#allocation0]]
  $region34: #{linear_norm_forward.1} parent=0
    _
  %s6 = ssub.s32 1, %s4
  %s7 = scalar_select 0, %s6, %s4
  $region1: #{linear_norm_forward.1} parent=0
    #allocation3 [shape = 'u8[131072]{0}', space=vmem, size = 0x20000, scoped, tag = 'input window, operand 1, single buffered']
    #allocation4 [shape = 's32[1]{0}', space=sflag, size = 0x4, scoped, tag = 'scoped memory for linear_norm_forward.1']
    %8 = vsyncpa [#allocation4], 0
    // Predicated region
    $region2: #{linear_norm_forward.1} parent=1 // pred_check
      _
    $region3: #{linear_norm_forward.1} parent=1 // pred_check_branch
      %10 = sbr.rel (0) target = $region5
    $region4: #{linear_norm_forward.1} parent=1 // pred_region
      _
    $region5: #{linear_norm_forward.1} parent=1 // pred_fallthru
      _
    // Predicated region
    $region6: #{linear_norm_forward.1} parent=1 // pred_check
      _
    $region7: #{linear_norm_forward.1} parent=1 // pred_check_branch
      %12 = sbr.rel (0) target = $region9
    $region8: #{linear_norm_forward.1} parent=1 // pred_region
      %s14 = ssub.s32 4096, 4096
      %15 = vsyncadd [#allocation4], %s14
      %s16 = sshll.u32 [#allocation3], 4
      %s17 = int_to_ptr.vmem [resolvable:$true] %s16
      %22 = dma.hbm_to_vmem [thread:$0]  %s1, 4096, %s17, [#allocation4], 128, 128, 8
    $region9: #{linear_norm_forward.1} parent=1 // pred_fallthru
      _
    // Predicated region
    $region10: #{linear_norm_forward.1} parent=1 // pred_check
      _
    $region11: #{linear_norm_forward.1} parent=1 // pred_check_branch
      %24 = sbr.rel (0) target = $region13
    $region12: #{linear_norm_forward.1} parent=1 // pred_region
      _
    $region13: #{linear_norm_forward.1} parent=1 // pred_fallthru
      _
    // Predicated region
    $region14: #{linear_norm_forward.1} parent=1 // pred_check
      _
    $region15: #{linear_norm_forward.1} parent=1 // pred_check_branch
      %26 = sbr.rel (0) target = $region17
    $region16: #{linear_norm_forward.1} parent=1 // pred_region
      %27 = dma.done [#allocation4], 4096
    $region17: #{linear_norm_forward.1} parent=1 // pred_fallthru
      _
    %p28 = scmp.eq.s32.totalorder 0, 0
    // Predicated region
    $region18: #{linear_norm_forward.1} parent=1 // pred_check
      %p29 = pneg %p28
    $region19: #{linear_norm_forward.1} parent=1 // pred_check_branch
      %31 = sbr.rel (%p29) target = $region21
    $region20: #{linear_norm_forward.1} parent=1 // pred_region
      %v32 = vld [vmem:[%s2] sm:$0x3]
      %v34 = vlaneseq
      %v35 = vshrl.u32 %v34, 7
      %v36 = vsub.s32 0, %v35
      %v37 = vrot.slane %v32, %v36
      %v38 = vlaneseq
      %v39 = vshrl.u32 %v38, 7
      %v40 = vsub.s32 1, %v39
      %v41 = vrot.slane %v32, %v40
      %44 = vst [vmem:[#allocation2] sm:$0xff] %v37
      %45 = vst [vmem:[#allocation2 + $0x8] sm:$0xff] %v41
      %46 = vst [vmem:[#allocation2 + $0x10] sm:$0xff] %v37
      %47 = vst [vmem:[#allocation2 + $0x18] sm:$0xff] %v41
    $region21: #{linear_norm_forward.1} parent=1 // pred_fallthru
      _
    %v48 = vld [vmem:[#allocation2] sm:$0xff]
    %v49 = vld [vmem:[#allocation2 + $0x8] sm:$0xff]
    %v50 = vld [vmem:[#allocation2 + $0x10] sm:$0xff]
    %v51 = vld [vmem:[#allocation2 + $0x18] sm:$0xff]
    %v52 = vld [vmem:[%s0] sm:$0xff]
    %v53 = vld [vmem:[%s0 + $0x8] sm:$0xff]
    %v54 = vld [vmem:[#allocation3] sm:$0xff]
    %v55 = vld [vmem:[#allocation3 + $0x8] sm:$0xff]
    %v56 = vld [vmem:[#allocation3 + $0x10] sm:$0xff]
    %v57 = vld [vmem:[#allocation3 + $0x18] sm:$0xff]
    %v58 = vld [vmem:[#allocation3 + $0x20] sm:$0xff]
    %v59 = vld [vmem:[#allocation3 + $0x28] sm:$0xff]
    %v60 = vld [vmem:[#allocation3 + $0x30] sm:$0xff]
    %v61 = vld [vmem:[#allocation3 + $0x38] sm:$0xff]
    %v62 = vld [vmem:[#allocation3 + $0x40] sm:$0xff]
    %v63 = vld [vmem:[#allocation3 + $0x48] sm:$0xff]
    %v64 = vld [vmem:[#allocation3 + $0x50] sm:$0xff]
    %v65 = vld [vmem:[#allocation3 + $0x58] sm:$0xff]
    %v66 = vld [vmem:[#allocation3 + $0x60] sm:$0xff]
    %v67 = vld [vmem:[#allocation3 + $0x68] sm:$0xff]
    %v68 = vld [vmem:[#allocation3 + $0x70] sm:$0xff]
    %v69 = vld [vmem:[#allocation3 + $0x78] sm:$0xff]
    %v70 = vld [vmem:[#allocation3 + $0x80] sm:$0xff]
    %v71 = vld [vmem:[#allocation3 + $0x88] sm:$0xff]
    %v72 = vld [vmem:[#allocation3 + $0x90] sm:$0xff]
    %v73 = vld [vmem:[#allocation3 + $0x98] sm:$0xff]
    %v74 = vld [vmem:[#allocation3 + $0xa0] sm:$0xff]
    %v75 = vld [vmem:[#allocation3 + $0xa8] sm:$0xff]
    %v76 = vld [vmem:[#allocation3 + $0xb0] sm:$0xff]
    %v77 = vld [vmem:[#allocation3 + $0xb8] sm:$0xff]
    %v78 = vld [vmem:[#allocation3 + $0xc0] sm:$0xff]
    %v79 = vld [vmem:[#allocation3 + $0xc8] sm:$0xff]
    %v80 = vld [vmem:[#allocation3 + $0xd0] sm:$0xff]
    %v81 = vld [vmem:[#allocation3 + $0xd8] sm:$0xff]
    %v82 = vld [vmem:[#allocation3 + $0xe0] sm:$0xff]
    %v83 = vld [vmem:[#allocation3 + $0xe8] sm:$0xff]
    %v84 = vld [vmem:[#allocation3 + $0xf0] sm:$0xff]
    %v85 = vld [vmem:[#allocation3 + $0xf8] sm:$0xff]
    %v88 = vunpack.c.l.b16 %v52
    %v89 = vunpack.c.h.b16 %v52
    %v90 = vunpack.c.l.b16 %v53
    %v91 = vunpack.c.h.b16 %v53
    %v92 = vpack.c.b16 %v90, %v88
    %v93 = vpack.c.b16 %v91, %v89
    %v128 = vunpack.c.l.b16 %v54
    %v129 = vunpack.c.h.b16 %v54
    %v130 = vunpack.c.l.b16 %v55
    %v131 = vunpack.c.h.b16 %v55
    %v132 = vunpack.c.l.b16 %v56
    %v133 = vunpack.c.h.b16 %v56
    %v134 = vunpack.c.l.b16 %v57
    %v135 = vunpack.c.h.b16 %v57
    %v136 = vunpack.c.l.b16 %v58
    %v137 = vunpack.c.h.b16 %v58
    %v138 = vunpack.c.l.b16 %v59
    %v139 = vunpack.c.h.b16 %v59
    %v140 = vunpack.c.l.b16 %v60
    %v141 = vunpack.c.h.b16 %v60
    %v142 = vunpack.c.l.b16 %v61
    %v143 = vunpack.c.h.b16 %v61
    %v144 = vunpack.c.l.b16 %v62
    %v145 = vunpack.c.h.b16 %v62
    %v146 = vunpack.c.l.b16 %v63
    %v147 = vunpack.c.h.b16 %v63
    %v148 = vunpack.c.l.b16 %v64
    %v149 = vunpack.c.h.b16 %v64
    %v150 = vunpack.c.l.b16 %v65
    %v151 = vunpack.c.h.b16 %v65
    %v152 = vunpack.c.l.b16 %v66
    %v153 = vunpack.c.h.b16 %v66
    %v154 = vunpack.c.l.b16 %v67
    %v155 = vunpack.c.h.b16 %v67
    %v156 = vunpack.c.l.b16 %v68
    %v157 = vunpack.c.h.b16 %v68
    %v158 = vunpack.c.l.b16 %v69
    %v159 = vunpack.c.h.b16 %v69
    %v160 = vunpack.c.l.b16 %v70
    %v161 = vunpack.c.h.b16 %v70
    %v162 = vunpack.c.l.b16 %v71
    %v163 = vunpack.c.h.b16 %v71
    %v164 = vunpack.c.l.b16 %v72
    %v165 = vunpack.c.h.b16 %v72
    %v166 = vunpack.c.l.b16 %v73
    %v167 = vunpack.c.h.b16 %v73
    %v168 = vunpack.c.l.b16 %v74
    %v169 = vunpack.c.h.b16 %v74
    %v170 = vunpack.c.l.b16 %v75
    %v171 = vunpack.c.h.b16 %v75
    %v172 = vunpack.c.l.b16 %v76
    %v173 = vunpack.c.h.b16 %v76
    %v174 = vunpack.c.l.b16 %v77
    %v175 = vunpack.c.h.b16 %v77
    %v176 = vunpack.c.l.b16 %v78
    %v177 = vunpack.c.h.b16 %v78
    %v178 = vunpack.c.l.b16 %v79
    %v179 = vunpack.c.h.b16 %v79
    %v180 = vunpack.c.l.b16 %v80
    %v181 = vunpack.c.h.b16 %v80
    %v182 = vunpack.c.l.b16 %v81
    %v183 = vunpack.c.h.b16 %v81
    %v184 = vunpack.c.l.b16 %v82
    %v185 = vunpack.c.h.b16 %v82
    %v186 = vunpack.c.l.b16 %v83
    %v187 = vunpack.c.h.b16 %v83
    %v188 = vunpack.c.l.b16 %v84
    %v189 = vunpack.c.h.b16 %v84
    %v190 = vunpack.c.l.b16 %v85
    %v191 = vunpack.c.h.b16 %v85
    %v192 = vpack.c.b16 %v130, %v128
    %v193 = vpack.c.b16 %v131, %v129
    %v194 = vpack.c.b16 %v134, %v132
    %v195 = vpack.c.b16 %v135, %v133
    %v196 = vpack.c.b16 %v138, %v136
    %v197 = vpack.c.b16 %v139, %v137
    %v198 = vpack.c.b16 %v142, %v140
    %v199 = vpack.c.b16 %v143, %v141
    %v200 = vpack.c.b16 %v146, %v144
    %v201 = vpack.c.b16 %v147, %v145
    %v202 = vpack.c.b16 %v150, %v148
    %v203 = vpack.c.b16 %v151, %v149
    %v204 = vpack.c.b16 %v154, %v152
    %v205 = vpack.c.b16 %v155, %v153
    %v206 = vpack.c.b16 %v158, %v156
    %v207 = vpack.c.b16 %v159, %v157
    %v208 = vpack.c.b16 %v162, %v160
    %v209 = vpack.c.b16 %v163, %v161
    %v210 = vpack.c.b16 %v166, %v164
    %v211 = vpack.c.b16 %v167, %v165
    %v212 = vpack.c.b16 %v170, %v168
    %v213 = vpack.c.b16 %v171, %v169
    %v214 = vpack.c.b16 %v174, %v172
    %v215 = vpack.c.b16 %v175, %v173
    %v216 = vpack.c.b16 %v178, %v176
    %v217 = vpack.c.b16 %v179, %v177
    %v218 = vpack.c.b16 %v182, %v180
    %v219 = vpack.c.b16 %v183, %v181
    %v220 = vpack.c.b16 %v186, %v184
    %v221 = vpack.c.b16 %v187, %v185
    %v222 = vpack.c.b16 %v190, %v188
    %v223 = vpack.c.b16 %v191, %v189
    %256 = vmatprep.subr.bf16.mxu0 %v193
    %257 = vmatpush1.bf16.msra.mxu0 %v192
    %258 = vmatprep.subr.bf16.mxu0 %v195
    %259 = vmatpush1.bf16.msra.mxu0 %v194
    %260 = vmatprep.subr.bf16.mxu0 %v197
    %261 = vmatpush1.bf16.msra.mxu0 %v196
    %262 = vmatprep.subr.bf16.mxu0 %v199
    %263 = vmatpush1.bf16.msra.mxu0 %v198
    %264 = vmatprep.subr.bf16.mxu0 %v201
    %265 = vmatpush1.bf16.msra.mxu0 %v200
    %266 = vmatprep.subr.bf16.mxu0 %v203
    %267 = vmatpush1.bf16.msra.mxu0 %v202
    %268 = vmatprep.subr.bf16.mxu0 %v205
    %269 = vmatpush1.bf16.msra.mxu0 %v204
    %270 = vmatprep.subr.bf16.mxu0 %v207
    %271 = vmatpush1.bf16.msra.mxu0 %v206
    %272 = vmatprep.subr.bf16.mxu0 %v209
    %273 = vmatpush1.bf16.msra.mxu0 %v208
    %274 = vmatprep.subr.bf16.mxu0 %v211
    %275 = vmatpush1.bf16.msra.mxu0 %v210
    %276 = vmatprep.subr.bf16.mxu0 %v213
    %277 = vmatpush1.bf16.msra.mxu0 %v212
    %278 = vmatprep.subr.bf16.mxu0 %v215
    %279 = vmatpush1.bf16.msra.mxu0 %v214
    %280 = vmatprep.subr.bf16.mxu0 %v217
    %281 = vmatpush1.bf16.msra.mxu0 %v216
    %282 = vmatprep.subr.bf16.mxu0 %v219
    %283 = vmatpush1.bf16.msra.mxu0 %v218
    %284 = vmatprep.subr.bf16.mxu0 %v221
    %285 = vmatpush1.bf16.msra.mxu0 %v220
    %286 = vmatprep.subr.bf16.mxu0 %v223
    %287 = vmatpush1.bf16.msra.mxu0 %v222
    %288 = vmatprep.mubr.bf16.mxu0 %v93
    %289 = vmatmul.mubr.bf16.gmra.mrb[0].mxu0 %v92
    %v290 = vpop.f32.mrb[0].mxu0
    %v291 = vadd.f32 0.0, %v290
    %v292 = vpop.f32.mrb[0].mxu0
    %v293 = vadd.f32 0.0, %v292
    %v294 = vpop.f32.mrb[0].mxu0
    %v295 = vadd.f32 0.0, %v294
    %v296 = vpop.f32.mrb[0].mxu0
    %v297 = vadd.f32 0.0, %v296
    %298 = vdwg.mxu0
    %v299 = vadd.f32 %v48, %v291
    %v300 = vadd.f32 %v49, %v293
    %v301 = vadd.f32 %v50, %v295
    %v302 = vadd.f32 %v51, %v297
    %303 = vst [vmem:[#allocation2] sm:$0xff] %v299
    %304 = vst [vmem:[#allocation2 + $0x8] sm:$0xff] %v300
    %305 = vst [vmem:[#allocation2 + $0x10] sm:$0xff] %v301
    %306 = vst [vmem:[#allocation2 + $0x18] sm:$0xff] %v302
    // Predicated region
    $region22: #{linear_norm_forward.1} parent=1 // pred_check
      %p307 = pneg %p28
    $region23: #{linear_norm_forward.1} parent=1 // pred_check_branch
      %309 = sbr.rel (%p307) target = $region25
    $region24: #{linear_norm_forward.1} parent=1 // pred_region
      %v310 = vld [vmem:[#allocation2] sm:$0xff]
      %v311 = vld [vmem:[#allocation2 + $0x8] sm:$0xff]
      %v312 = vld [vmem:[#allocation2 + $0x10] sm:$0xff]
      %v313 = vld [vmem:[#allocation2 + $0x18] sm:$0xff]
      %314 = vst [vmem:[%s3] sm:$0xff] %v310
      %315 = vst [vmem:[%s3 + $0x8] sm:$0xff] %v311
      %316 = vst [vmem:[%s3 + $0x10] sm:$0xff] %v312
      %317 = vst [vmem:[%s3 + $0x18] sm:$0xff] %v313
    $region25: #{linear_norm_forward.1} parent=1 // pred_fallthru
      _
    // Predicated region
    $region26: #{linear_norm_forward.1} parent=1 // pred_check
      _
    $region27: #{linear_norm_forward.1} parent=1 // pred_check_branch
      %319 = sbr.rel (0) target = $region29
    $region28: #{linear_norm_forward.1} parent=1 // pred_region
      _
    $region29: #{linear_norm_forward.1} parent=1 // pred_fallthru
      _
    // Predicated region
    $region30: #{linear_norm_forward.1} parent=1 // pred_check
      _
    $region31: #{linear_norm_forward.1} parent=1 // pred_check_branch
      %321 = sbr.rel (0) target = $region33
    $region32: #{linear_norm_forward.1} parent=1 // pred_region
      _
    $region33: #{linear_norm_forward.1} parent=1 // pred_fallthru
      _
    %322 = vsyncpa [#allocation4], 1

</llo_original>
